<compile_context>
chip_gen: v7x
topology: tpu7x:2x2x1
jax: 0.10.0
libtpu: 0.0.40
codegen_flags: <defaults>
</compile_context>

<pallas_src>
import math
import numpy as np
import jax
import jax.numpy as jnp
from jax.experimental import pallas as pl
from jax.experimental.pallas import tpu as pltpu


# ---------------------------------------------------------------------------
# Kernel: K-tiled fused pooling matmul (MXU) with f32 accumulator and an
# exact per-column 1/(kh*kw) scale applied in the epilogue (VPU).
# Grid = (row_tiles, k_tiles); k_tiles is 1 in the common resident-M case.
# ---------------------------------------------------------------------------
def _spp_matmul_kernel(x_ref, m_ref, s_ref, o_ref, acc_ref):
    @pl.when(pl.program_id(1) == 0)
    def _():
        acc_ref[...] = jnp.zeros_like(acc_ref)

    acc_ref[...] += jnp.dot(
        x_ref[...], m_ref[...], preferred_element_type=jnp.float32
    )

    @pl.when(pl.program_id(1) == pl.num_programs(1) - 1)
    def _():
        o_ref[...] = (acc_ref[...] * s_ref[...]).astype(o_ref.dtype)


# ---------------------------------------------------------------------------
# Trace-time helpers (pure Python / numpy).
# ---------------------------------------------------------------------------
def _level_params(H, W, n):
    # Mirrors the arithmetic in the PyTorch module exactly.
    h_wid = int(math.ceil(H / n))
    w_wid = int(math.ceil(W / n))
    h_pad = min(int((h_wid * n - H + 1) / 2), h_wid // 2)
    w_pad = min(int((w_wid * n - W + 1) / 2), w_wid // 2)
    # AvgPool2d output size (ceil_mode=False):
    out_h = (H + 2 * h_pad - h_wid) // h_wid + 1
    out_w = (W + 2 * w_pad - w_wid) // w_wid + 1
    return h_wid, w_wid, h_pad, w_pad, out_h, out_w


def _pool_matrix_unpadded(H, W, kh, kw, ph, pw, oh, ow):
    # M[h*W + w, g*ow + o] = 1.0 if unpadded pixel (h, w) lies inside pooling
    # window (g, o) of the *padded* image.  Taps landing in the zero padding
    # are omitted; the 1/(kh*kw) divisor is applied later as an f32 scale
    # (count_include_pad=True), so results match PyTorch exactly.
    M = np.zeros((H * W, oh * ow), dtype=np.float32)
    for g in range(oh):
        for o in range(ow):
            col = g * ow + o
            for dh in range(kh):
                h = g * kh + dh - ph
                if h < 0 or h >= H:
                    continue
                for dw in range(kw):
                    w = o * kw + dw - pw
                    if 0 <= w < W:
                        M[h * W + w, col] = 1.0
    return M


def _build_fused_pool_matrix(H, W, out_pool_size):
    mats, scales, level_sizes = [], [], []
    for n in out_pool_size:
        kh, kw, ph, pw, oh, ow = _level_params(H, W, n)
        mats.append(_pool_matrix_unpadded(H, W, kh, kw, ph, pw, oh, ow))
        scales.append(np.full((oh * ow,), 1.0 / (kh * kw), dtype=np.float32))
        level_sizes.append(oh * ow)
    M_all = np.concatenate(mats, axis=1)
    scale = np.concatenate(scales)
    total_cols = M_all.shape[1]
    # Pad output columns to a multiple of 128 -> lane-dense (unmasked) stores.
    # TODO(synk): for very small H*W the padded write is ~6x the useful bytes;
    # a full-last-dim (masked) store may win there — benchmark per shape.
    cols_padded = max(128, ((total_cols + 127) // 128) * 128)
    if cols_padded != total_cols:
        pad = cols_padded - total_cols
        M_all = np.pad(M_all, ((0, 0), (0, pad)))
        scale = np.pad(scale, (0, pad), constant_values=1.0)
    return M_all, scale.reshape(1, cols_padded), level_sizes, total_cols, cols_padded


def _round_up(x, m):
    return ((x + m - 1) // m) * m


def _sublane_align(dtype):
    # Rows per packed sublane group: 8 (32-bit), 16 (bf16/f16), 32 (int8/fp8).
    return max(8, 32 // max(1, jnp.dtype(dtype).itemsize))


def _vmem_budget_bytes():
    # Generation-aware budget derived from physical VMEM:
    #   v5e/v6e (128 MiB) -> limit 96 MiB;  v7x (64 MiB/TC) -> limit 48 MiB.
    try:
        cap = int(pltpu.get_tpu_info().vmem_capacity_bytes)
    except Exception:
        cap = 64 * 1024 * 1024  # conservative fallback (v7x per-TC)
    limit = min(cap - 16 * 1024 * 1024, 96 * 1024 * 1024)
    limit = max(limit, 32 * 1024 * 1024)
    budget = int(limit * 0.8)  # headroom for compiler-internal scratch/spills
    return budget, limit


def _plan_tiles(NC, HW, cols_padded, x_dtype):
    x_dsize = jnp.dtype(x_dtype).itemsize
    out_dsize = x_dsize
    align = _sublane_align(x_dtype)
    budget, vmem_limit = _vmem_budget_bytes()

    # --- K (H*W) tiling: keep M resident when it fits; Pallas double-buffers
    # every input BlockSpec (even the grid-invariant M), so count it 2x.
    m_bytes_full = 2 * HW * cols_padded * x_dsize
    if m_bytes_full <= budget // 2:
        tk = HW  # single K step, M fully resident (common case)
    else:
        tk = ((budget // 2) // (2 * cols_padded * x_dsize)) // 128 * 128
        tk = max(512, tk)
        tk = min(tk, _round_up(HW, 128))
    kc = max(1, pl.cdiv(HW, tk))
    HW_pad = tk * kc

    # --- Row (N*C) tiling: as large as remaining VMEM allows (amortizes the
    # ~0.35 us per-grid-step overhead; streams multi-MiB contiguous x tiles).
    fixed = 2 * tk * cols_padded * x_dsize + 2 * cols_padded * 4  # M + scale
    per_row = (2 * tk * x_dsize            # double-buffered x tile
               + 2 * cols_padded * out_dsize  # double-buffered out tile
               + cols_padded * 4)             # f32 accumulator scratch
    tm_max = max(align, (budget - fixed) // max(per_row, 1))
    tm = min(NC, 4096, int(tm_max))
    # Megacore-friendly: >= 2 row tiles whenever N*C allows it (2 TCs on v7x).
    if NC > align:
        tm = min(tm, _round_up(pl.cdiv(NC, 2), align))
    if tm < NC:
        if tm >= 256:
            tm = (tm // 256) * 256          # full MXU passes per tile
        else:
            tm = max(align, (tm // align) * align)
    return tm, tk, kc, HW_pad, vmem_limit


# ---------------------------------------------------------------------------
# Forward pass.
# ---------------------------------------------------------------------------
def spp_pooling(x, out_pool_size):
    """SPPooling forward.  x: (N, C, H, W) -> (N, C * sum_i oh_i*ow_i)."""
    N, C, H, W = x.shape
    NC, HW = N * C, H * W

    M_np, scale_np, level_sizes, total_cols, cols_padded = (
        _build_fused_pool_matrix(H, W, out_pool_size)
    )
    tm, tk, kc, HW_pad, vmem_limit = _plan_tiles(NC, HW, cols_padded, x.dtype)

    x2 = x.reshape(NC, HW)  # row-major over (h, w) — same as torch.flatten
    if HW_pad != HW:
        # Rare K-tiled path (huge feature maps): zero-pad the reduction axis
        # so partial K blocks never read garbage (zero rows of M kill it too).
        x2 = jnp.pad(x2, ((0, 0), (0, HW_pad - HW)))
        M_np = np.pad(M_np, ((0, HW_pad - HW), (0, 0)))

    # M holds exact 0/1 -> safe to store in x.dtype (bf16 halves its VMEM/DMA
    # footprint and takes the native bf16 MXU path); the exact f32 divisor is
    # applied in the kernel epilogue.
    M_all = jnp.asarray(M_np, dtype=x.dtype)
    scale = jnp.asarray(scale_np, dtype=jnp.float32)

    dsize = jnp.dtype(x.dtype).itemsize
    grid = (pl.cdiv(NC, tm), kc)

    out = pl.pallas_call(
        _spp_matmul_kernel,
        out_shape=jax.ShapeDtypeStruct((NC, cols_padded), x.dtype),
        grid_spec=pltpu.PrefetchScalarGridSpec(
            num_scalar_prefetch=0,
            grid=grid,
            in_specs=[
                pl.BlockSpec((tm, tk), lambda i, k: (i, k)),            # x tile
                pl.BlockSpec((tk, cols_padded), lambda i, k: (k, 0)),   # M tile
                pl.BlockSpec((1, cols_padded), lambda i, k: (0, 0)),    # scale
            ],
            out_specs=pl.BlockSpec((tm, cols_padded), lambda i, k: (i, 0)),
            scratch_shapes=[pltpu.VMEM((tm, cols_padded), jnp.float32)],
        ),
        compiler_params=pltpu.CompilerParams(
            dimension_semantics=("parallel", "arbitrary"),
            vmem_limit_bytes=vmem_limit,
        ),
        cost_estimate=pl.CostEstimate(
            flops=2 * NC * HW_pad * cols_padded,
            transcendentals=0,
            bytes_accessed=(NC * HW_pad + kc * HW_pad * cols_padded
                            + NC * cols_padded) * dsize,
        ),
    )(x2, M_all, scale)

    # Re-order columns to match torch: per level (N, C, oh*ow) -> (N, C*oh*ow),
    # then concatenate levels along dim 1.
    out3 = out[:, :total_cols].reshape(N, C, total_cols)
    pieces, start = [], 0
    for sz in level_sizes:
        pieces.append(out3[:, :, start:start + sz].reshape(N, C * sz))
        start += sz
    return jnp.concatenate(pieces, axis=1)


if __name__ == "__main__":
    key = jax.random.PRNGKey(0)
    N, C, H, W = 2, 4, 16, 16
    x = jax.random.normal(key, (N, C, H, W), dtype=jnp.float32)
    out_pool_size = (4, 2, 1)  # module "parameter" (no learnable weights)

    y = spp_pooling(x, out_pool_size)
    y = jax.block_until_ready(y)

    # Shape check: sum over levels of C * oh * ow = 4*(16 + 4 + 1) = 84
    assert y.shape == (N, C * (16 + 4 + 1)), y.shape

    # Pure-JAX reference (padding is 0 for these sizes, so simple reshape-mean).
    refs = []
    for n in out_pool_size:
        kh = math.ceil(H / n)
        kw = math.ceil(W / n)
        oh, ow = H // kh, W // kw
        r = x.reshape(N, C, oh, kh, ow, kw).mean(axis=(3, 5))
        refs.append(r.reshape(N, -1))
    ref = jnp.concatenate(refs, axis=1)
    assert jnp.allclose(y, ref, atol=1e-5), float(jnp.max(jnp.abs(y - ref)))

    print("KERNEL_OK")
</pallas_src>

<mosaic_0001>
module attributes {stable_mosaic.version = 11 : i64} {
  func.func @_spp_matmul_kernel(%arg0: i32, %arg1: i32, %arg2: memref<8x256xf32, #tpu.memory_space<vmem>>, %arg3: memref<256x128xf32, #tpu.memory_space<vmem>>, %arg4: memref<1x128xf32, #tpu.memory_space<vmem>>, %arg5: memref<8x128xf32, #tpu.memory_space<vmem>>, %arg6: memref<8x128xf32, #tpu.memory_space<vmem>>) attributes {dimension_semantics = [#tpu.dimension_semantics<parallel>, #tpu.dimension_semantics<arbitrary>], iteration_bounds = array<i64: 1, 1>, scalar_prefetch = 0 : i64, scratch_operands = 1 : i64, tpu.core_type = #tpu.core_type<tc>, window_params = [{transform_indices = @transform_0, window_bounds = array<i64: 8, 256>}, {transform_indices = @transform_1, window_bounds = array<i64: 256, 128>}, {pipeline_mode = #tpu.pipeline_mode<synchronous>, transform_indices = @transform_2, window_bounds = array<i64: 1, 128>}, {transform_indices = @transform_3, window_bounds = array<i64: 8, 128>}]} {
    %c0_i32 = arith.constant 0 : i32
    %0 = arith.cmpi eq, %arg1, %c0_i32 : i32
    %1 = arith.extui %0 : i1 to i32
    %c0_i32_0 = arith.constant 0 : i32
    %2 = arith.cmpi ne, %1, %c0_i32_0 : i32
    scf.if %2 {
      %cst_10 = arith.constant 0.000000e+00 : f32
      %12 = vector.broadcast %cst_10 : f32 to vector<8x128xf32>
      %c0_11 = arith.constant 0 : index
      %c0_12 = arith.constant 0 : index
      %13 = vector.load %arg6[%c0_11, %c0_12] : memref<8x128xf32, #tpu.memory_space<vmem>>, vector<8x128xf32>
      tpu.vector_store %arg6[%c0_11, %c0_12], %12 {strides = array<i32>} : memref<8x128xf32, #tpu.memory_space<vmem>>, vector<8x128xf32>,
    } else {
    }
    %c0 = arith.constant 0 : index
    %c0_1 = arith.constant 0 : index
    %3 = vector.load %arg6[%c0, %c0_1] : memref<8x128xf32, #tpu.memory_space<vmem>>, vector<8x128xf32>
    %c0_2 = arith.constant 0 : index
    %c0_3 = arith.constant 0 : index
    %4 = vector.load %arg2[%c0_2, %c0_3] : memref<8x256xf32, #tpu.memory_space<vmem>>, vector<8x256xf32>
    %c0_4 = arith.constant 0 : index
    %c0_5 = arith.constant 0 : index
    %5 = vector.load %arg3[%c0_4, %c0_5] : memref<256x128xf32, #tpu.memory_space<vmem>>, vector<256x128xf32>
    %cst = arith.constant dense<0.000000e+00> : vector<8x128xf32>
    %6 = tpu.matmul %4, %5, %cst {dimension_numbers = #tpu.dot_dimension_numbers<[1], [0], [0], [1], [0, 0, 1, 1], [], []>} : vector<8x256xf32>, vector<256x128xf32>, vector<8x128xf32> -> vector<8x128xf32>
    %7 = arith.addf %3, %6 : vector<8x128xf32>
    %c0_6 = arith.constant 0 : index
    %c0_7 = arith.constant 0 : index
    %8 = vector.load %arg6[%c0_6, %c0_7] : memref<8x128xf32, #tpu.memory_space<vmem>>, vector<8x128xf32>
    tpu.vector_store %arg6[%c0_6, %c0_7], %7 {strides = array<i32>} : memref<8x128xf32, #tpu.memory_space<vmem>>, vector<8x128xf32>,
    %c0_i32_8 = arith.constant 0 : i32
    %9 = arith.cmpi eq, %arg1, %c0_i32_8 : i32
    %10 = arith.extui %9 : i1 to i32
    %c0_i32_9 = arith.constant 0 : i32
    %11 = arith.cmpi ne, %10, %c0_i32_9 : i32
    scf.if %11 {
      %c0_10 = arith.constant 0 : index
      %c0_11 = arith.constant 0 : index
      %12 = vector.load %arg6[%c0_10, %c0_11] : memref<8x128xf32, #tpu.memory_space<vmem>>, vector<8x128xf32>
      %c0_12 = arith.constant 0 : index
      %c0_13 = arith.constant 0 : index
      %13 = vector.load %arg4[%c0_12, %c0_13] : memref<1x128xf32, #tpu.memory_space<vmem>>, vector<1x128xf32>
      %14 = vector.broadcast %13 : vector<1x128xf32> to vector<8x128xf32>
      %15 = arith.mulf %12, %14 : vector<8x128xf32>
      %c0_14 = arith.constant 0 : index
      %c0_15 = arith.constant 0 : index
      %16 = vector.load %arg5[%c0_14, %c0_15] : memref<8x128xf32, #tpu.memory_space<vmem>>, vector<8x128xf32>
      tpu.vector_store %arg5[%c0_14, %c0_15], %15 {strides = array<i32>} : memref<8x128xf32, #tpu.memory_space<vmem>>, vector<8x128xf32>,
    } else {
    }
    return
  }
  func.func @transform_0(%arg0: i32, %arg1: i32) -> (i32, i32) {
    %c0_i32 = arith.constant 0 : i32
    return %arg0, %arg1 : i32, i32
  }
  func.func @transform_1(%arg0: i32, %arg1: i32) -> (i32, i32) {
    %c0_i32 = arith.constant 0 : i32
    %c0_i32_0 = arith.constant 0 : i32
    return %arg1, %c0_i32 : i32, i32
  }
  func.func @transform_2(%arg0: i32, %arg1: i32) -> (i32, i32) {
    %c0_i32 = arith.constant 0 : i32
    %c0_i32_0 = arith.constant 0 : i32
    %c0_i32_1 = arith.constant 0 : i32
    return %c0_i32, %c0_i32_0 : i32, i32
  }
  func.func @transform_3(%arg0: i32, %arg1: i32) -> (i32, i32) {
    %c0_i32 = arith.constant 0 : i32
    %c0_i32_0 = arith.constant 0 : i32
    return %arg0, %c0_i32 : i32, i32
  }
}

</mosaic_0001>

<llo_original>
// kernel: tpu_custom_call.1
$region0: #{tpu_custom_call.1}
  #allocation0 [shape = 'u32[]', space=smem, size = 0x4, offset = 0x4, fixed_abs, tag = 'smem constant byte address 0x4 - core index']
  #allocation1 [shape = 'u32[144,128]{1,0:T(1,128)}', space=vmem, size = 0x12000, scoped, tag = 'internal scratch']
  #allocation2 [shape = 'f32[8,128]{1,0:T(8,128)}', space=vmem, size = 0x1000, scoped, tag = 'scratch operand']
  %s0 = inlined_call_operand.hbm [shape: f32[8,256], index: 0, kind: input, shape index: {}]
  %s1 = inlined_call_operand.hbm [shape: f32[256,128], index: 1, kind: input, shape index: {}]
  %s2 = inlined_call_operand.vmem [shape: f32[1,128], index: 2, kind: input, shape index: {}]
  %s3 = inlined_call_operand.hbm [shape: f32[8,128], index: 3, kind: output, shape index: {}]
  %s4 = sld [smem:[#allocation0]]
  $region38: #{tpu_custom_call.1} parent=0
    _
  %s6 = ssub.s32 1, %s4
  %s7 = scalar_select 0, %s6, %s4
  $region1: #{tpu_custom_call.1} parent=0
    #allocation3 [shape = 'u8[8192]{0}', space=vmem, size = 0x2000, scoped, tag = 'input window, operand 0, single buffered']
    #allocation4 [shape = 's32[1]{0}', space=sflag, size = 0x4, scoped, tag = 'scoped memory for tpu_custom_call.1']
    #allocation5 [shape = 's32[1]{0}', space=sflag, size = 0x4, scoped, tag = 'scoped memory for tpu_custom_call.1']
    #allocation6 [shape = 'u8[131072]{0}', space=vmem, size = 0x20000, scoped, tag = 'input window, operand 1, single buffered']
    #allocation7 [shape = 's32[1]{0}', space=sflag, size = 0x4, scoped, tag = 'scoped memory for tpu_custom_call.1']
    #allocation8 [shape = 'u8[4096]{0}', space=vmem, size = 0x1000, scoped, tag = 'output window, operand 0, single buffered']
    %8 = vsyncpa [#allocation4], 0
    %9 = vsyncpa [#allocation7], 0
    %10 = vsyncpa [#allocation5], 0
    // Predicated region
    $region2: #{tpu_custom_call.1} parent=1 // pred_check
      _
    $region3: #{tpu_custom_call.1} parent=1 // pred_check_branch
      %12 = sbr.rel (0) target = $region5
    $region4: #{tpu_custom_call.1} parent=1 // pred_region
      %s14 = ssub.s32 256, 256
      %15 = vsyncadd [#allocation4], %s14
      %s17 = sshll.u32 [#allocation3], 4
      %s18 = int_to_ptr.vmem [resolvable:$true] %s17
      %20 = dma.hbm_to_vmem [thread:$0]  %s0, 256, %s18, [#allocation4]
    $region5: #{tpu_custom_call.1} parent=1 // pred_fallthru
      _
    // Predicated region
    $region6: #{tpu_custom_call.1} parent=1 // pred_check
      _
    $region7: #{tpu_custom_call.1} parent=1 // pred_check_branch
      %22 = sbr.rel (0) target = $region9
    $region8: #{tpu_custom_call.1} parent=1 // pred_region
      %s24 = ssub.s32 4096, 4096
      %25 = vsyncadd [#allocation7], %s24
      %s26 = sshll.u32 [#allocation6], 4
      %s27 = int_to_ptr.vmem [resolvable:$true] %s26
      %32 = dma.hbm_to_vmem [thread:$0]  %s1, 4096, %s27, [#allocation7], 128, 128, 8
    $region9: #{tpu_custom_call.1} parent=1 // pred_fallthru
      _
    // Predicated region
    $region10: #{tpu_custom_call.1} parent=1 // pred_check
      _
    $region11: #{tpu_custom_call.1} parent=1 // pred_check_branch
      %34 = sbr.rel (0) target = $region13
    $region12: #{tpu_custom_call.1} parent=1 // pred_region
      _
    $region13: #{tpu_custom_call.1} parent=1 // pred_fallthru
      _
    // Predicated region
    $region14: #{tpu_custom_call.1} parent=1 // pred_check
      _
    $region15: #{tpu_custom_call.1} parent=1 // pred_check_branch
      %36 = sbr.rel (0) target = $region17
    $region16: #{tpu_custom_call.1} parent=1 // pred_region
      %37 = dma.done [#allocation4], 256
    $region17: #{tpu_custom_call.1} parent=1 // pred_fallthru
      _
    // Predicated region
    $region18: #{tpu_custom_call.1} parent=1 // pred_check
      _
    $region19: #{tpu_custom_call.1} parent=1 // pred_check_branch
      %39 = sbr.rel (0) target = $region21
    $region20: #{tpu_custom_call.1} parent=1 // pred_region
      %40 = dma.done [#allocation7], 4096
    $region21: #{tpu_custom_call.1} parent=1 // pred_fallthru
      _
    %p41 = scmp.eq.s32.totalorder 0, 0
    // Predicated region
    $region22: #{tpu_custom_call.1} parent=1 // pred_check
      %p42 = pneg %p41
    $region23: #{tpu_custom_call.1} parent=1 // pred_check_branch
      %44 = sbr.rel (%p42) target = $region25
    $region24: #{tpu_custom_call.1} parent=1 // pred_region
      %45 = vst [vmem:[#allocation2] sm:$0xff] 0.0
    $region25: #{tpu_custom_call.1} parent=1 // pred_fallthru
      _
    %v46 = vld [vmem:[#allocation2] sm:$0xff]
    %v47 = vld [vmem:[#allocation3] sm:$0xff]
    %v48 = vld [vmem:[#allocation3 + $0x8] sm:$0xff]
    %v49 = vld [vmem:[#allocation6] sm:$0xff]
    %v50 = vld [vmem:[#allocation6 + $0x8] sm:$0xff]
    %v51 = vld [vmem:[#allocation6 + $0x10] sm:$0xff]
    %v52 = vld [vmem:[#allocation6 + $0x18] sm:$0xff]
    %v53 = vld [vmem:[#allocation6 + $0x20] sm:$0xff]
    %v54 = vld [vmem:[#allocation6 + $0x28] sm:$0xff]
    %v55 = vld [vmem:[#allocation6 + $0x30] sm:$0xff]
    %v56 = vld [vmem:[#allocation6 + $0x38] sm:$0xff]
    %v57 = vld [vmem:[#allocation6 + $0x40] sm:$0xff]
    %v58 = vld [vmem:[#allocation6 + $0x48] sm:$0xff]
    %v59 = vld [vmem:[#allocation6 + $0x50] sm:$0xff]
    %v60 = vld [vmem:[#allocation6 + $0x58] sm:$0xff]
    %v61 = vld [vmem:[#allocation6 + $0x60] sm:$0xff]
    %v62 = vld [vmem:[#allocation6 + $0x68] sm:$0xff]
    %v63 = vld [vmem:[#allocation6 + $0x70] sm:$0xff]
    %v64 = vld [vmem:[#allocation6 + $0x78] sm:$0xff]
    %v65 = vld [vmem:[#allocation6 + $0x80] sm:$0xff]
    %v66 = vld [vmem:[#allocation6 + $0x88] sm:$0xff]
    %v67 = vld [vmem:[#allocation6 + $0x90] sm:$0xff]
    %v68 = vld [vmem:[#allocation6 + $0x98] sm:$0xff]
    %v69 = vld [vmem:[#allocation6 + $0xa0] sm:$0xff]
    %v70 = vld [vmem:[#allocation6 + $0xa8] sm:$0xff]
    %v71 = vld [vmem:[#allocation6 + $0xb0] sm:$0xff]
    %v72 = vld [vmem:[#allocation6 + $0xb8] sm:$0xff]
    %v73 = vld [vmem:[#allocation6 + $0xc0] sm:$0xff]
    %v74 = vld [vmem:[#allocation6 + $0xc8] sm:$0xff]
    %v75 = vld [vmem:[#allocation6 + $0xd0] sm:$0xff]
    %v76 = vld [vmem:[#allocation6 + $0xd8] sm:$0xff]
    %v77 = vld [vmem:[#allocation6 + $0xe0] sm:$0xff]
    %v78 = vld [vmem:[#allocation6 + $0xe8] sm:$0xff]
    %v79 = vld [vmem:[#allocation6 + $0xf0] sm:$0xff]
    %v80 = vld [vmem:[#allocation6 + $0xf8] sm:$0xff]
    %81 = vmatprep.subr.mxu0 0.0
    %82 = vmatpush1.msra.mxu0 %v49
    %83 = vmatprep.subr.mxu0 0.0
    %84 = vmatpush1.msra.mxu0 %v50
    %85 = vmatprep.subr.mxu0 0.0
    %86 = vmatpush1.msra.mxu0 %v51
    %87 = vmatprep.subr.mxu0 0.0
    %88 = vmatpush1.msra.mxu0 %v52
    %89 = vmatprep.subr.mxu0 0.0
    %90 = vmatpush1.msra.mxu0 %v53
    %91 = vmatprep.subr.mxu0 0.0
    %92 = vmatpush1.msra.mxu0 %v54
    %93 = vmatprep.subr.mxu0 0.0
    %94 = vmatpush1.msra.mxu0 %v55
    %95 = vmatprep.subr.mxu0 0.0
    %96 = vmatpush1.msra.mxu0 %v56
    %97 = vmatprep.subr.mxu0 0.0
    %98 = vmatpush1.msra.mxu0 %v57
    %99 = vmatprep.subr.mxu0 0.0
    %100 = vmatpush1.msra.mxu0 %v58
    %101 = vmatprep.subr.mxu0 0.0
    %102 = vmatpush1.msra.mxu0 %v59
    %103 = vmatprep.subr.mxu0 0.0
    %104 = vmatpush1.msra.mxu0 %v60
    %105 = vmatprep.subr.mxu0 0.0
    %106 = vmatpush1.msra.mxu0 %v61
    %107 = vmatprep.subr.mxu0 0.0
    %108 = vmatpush1.msra.mxu0 %v62
    %109 = vmatprep.subr.mxu0 0.0
    %110 = vmatpush1.msra.mxu0 %v63
    %111 = vmatprep.subr.mxu0 0.0
    %112 = vmatpush1.msra.mxu0 %v64
    %113 = vmatprep.subr.mxu0 0.0
    %114 = vmatpush1.msra.mxu0 %v65
    %115 = vmatprep.subr.mxu0 0.0
    %116 = vmatpush1.msra.mxu0 %v66
    %117 = vmatprep.subr.mxu0 0.0
    %118 = vmatpush1.msra.mxu0 %v67
    %119 = vmatprep.subr.mxu0 0.0
    %120 = vmatpush1.msra.mxu0 %v68
    %121 = vmatprep.subr.mxu0 0.0
    %122 = vmatpush1.msra.mxu0 %v69
    %123 = vmatprep.subr.mxu0 0.0
    %124 = vmatpush1.msra.mxu0 %v70
    %125 = vmatprep.subr.mxu0 0.0
    %126 = vmatpush1.msra.mxu0 %v71
    %127 = vmatprep.subr.mxu0 0.0
    %128 = vmatpush1.msra.mxu0 %v72
    %129 = vmatprep.subr.mxu0 0.0
    %130 = vmatpush1.msra.mxu0 %v73
    %131 = vmatprep.subr.mxu0 0.0
    %132 = vmatpush1.msra.mxu0 %v74
    %133 = vmatprep.subr.mxu0 0.0
    %134 = vmatpush1.msra.mxu0 %v75
    %135 = vmatprep.subr.mxu0 0.0
    %136 = vmatpush1.msra.mxu0 %v76
    %137 = vmatprep.subr.mxu0 0.0
    %138 = vmatpush1.msra.mxu0 %v77
    %139 = vmatprep.subr.mxu0 0.0
    %140 = vmatpush1.msra.mxu0 %v78
    %141 = vmatprep.subr.mxu0 0.0
    %142 = vmatpush1.msra.mxu0 %v79
    %143 = vmatprep.subr.mxu0 0.0
    %144 = vmatpush1.msra.mxu0 %v80
    %145 = vmatprep.mubr.f32.mxu0 %v48
    %146 = vmatmul.mubr.f32.gmra.mrb[0].mxu0 %v47
    %v147 = vpop.f32.mrb[0].mxu0
    %v148 = vadd.f32 0.0, %v147
    %v149 = vpop.f32.mrb[0].mxu0
    %150 = vdwg.mxu0
    %v151 = vadd.f32 %v46, %v148
    %152 = vst [vmem:[#allocation2] sm:$0xff] %v151
    // Predicated region
    $region26: #{tpu_custom_call.1} parent=1 // pred_check
      %p153 = pneg %p41
    $region27: #{tpu_custom_call.1} parent=1 // pred_check_branch
      %155 = sbr.rel (%p153) target = $region29
    $region28: #{tpu_custom_call.1} parent=1 // pred_region
      %v156 = vld [vmem:[#allocation2] sm:$0xff]
      %v157 = vld [vmem:[%s2] sm:$0x1]
      %v159 = vlaneseq
      %v160 = vshrl.u32 %v159, 7
      %v161 = vsub.s32 0, %v160
      %v162 = vrot.slane %v157, %v161
      %v164 = vmul.f32 %v156, %v162
      %165 = vst [vmem:[#allocation8] sm:$0xff] %v164
    $region29: #{tpu_custom_call.1} parent=1 // pred_fallthru
      _
    // Predicated region
    $region30: #{tpu_custom_call.1} parent=1 // pred_check
      _
    $region31: #{tpu_custom_call.1} parent=1 // pred_check_branch
      %167 = sbr.rel (0) target = $region33
    $region32: #{tpu_custom_call.1} parent=1 // pred_region
      %s169 = ssub.s32 128, 128
      %170 = vsyncadd [#allocation5], %s169
      %s172 = sshll.u32 [#allocation8], 4
      %s173 = int_to_ptr.vmem [resolvable:$true] %s172
      %175 = dma.vmem_to_hbm [thread:$0]  %s173, 128, %s3, [#allocation5]
    $region33: #{tpu_custom_call.1} parent=1 // pred_fallthru
      _
    // Predicated region
    $region34: #{tpu_custom_call.1} parent=1 // pred_check
      _
    $region35: #{tpu_custom_call.1} parent=1 // pred_check_branch
      %177 = sbr.rel (0) target = $region37
    $region36: #{tpu_custom_call.1} parent=1 // pred_region
      %178 = dma.done [#allocation5], 128
    $region37: #{tpu_custom_call.1} parent=1 // pred_fallthru
      _
    %179 = vsyncpa [#allocation4], 1
    %180 = vsyncpa [#allocation7], 1
    %181 = vsyncpa [#allocation5], 1

</llo_original>
